<compile_context>
chip_gen: v7x
topology: tpu7x:2x2x1
jax: 0.10.0
libtpu: 0.0.40
codegen_flags: <defaults>
</compile_context>

<pallas_src>
import numpy as np
import jax
import jax.numpy as jnp
from jax.experimental import pallas as pl
from jax.experimental.pallas import tpu as pltpu


# ----------------------------------------------------------------------------
# Bicubic interpolation weights matching F.interpolate(mode='bicubic',
# align_corners=False) (PyTorch a = -0.75).  Only used when the new feature
# shape differs from the old one -- which never happens for this module
# (__init__ sets both to imgH//patch_size, imgW//patch_size), so this branch is
# dead at trace time and costs nothing.
# ----------------------------------------------------------------------------
def _cubic_w(t, a=-0.75):
    t = abs(float(t))
    if t <= 1.0:
        return (a + 2.0) * t**3 - (a + 3.0) * t**2 + 1.0
    if t < 2.0:
        return a * t**3 - 5.0 * a * t**2 + 8.0 * a * t - 4.0 * a
    return 0.0


def bicubic_matrix(new, old):
    W = np.zeros((new, old), dtype=np.float32)
    scale = old / new
    for i in range(new):
        src = (i + 0.5) * scale - 0.5
        i0 = int(np.floor(src))
        t = src - i0
        for di in range(-1, 3):
            w = _cubic_w(t - di)
            j = min(max(i0 + di, 0), old - 1)
            W[i, j] += w
    return jnp.asarray(W)


# ----------------------------------------------------------------------------
# Pallas kernel: for a tile of `bt` batches build the full (bt, S+1, C) output
#   out[:, 0, :]  = cls_token + pos_embed[0]      (pre-combined row0)
#   out[:, 1:, :] = x + pos_embed[1:]             (aligned image-token pe)
# and store it with a single full-block (unmasked) store.
# ----------------------------------------------------------------------------
def add_pos_kernel(x_ref, row0_ref, pe_ref, o_ref):
    # x_ref   : (bt, S, C)    image tokens for this batch tile
    # row0_ref: (1, 1, C)     cls_token + pos_embed[:, 0]   (constant block)
    # pe_ref  : (S, C)        image-token positional embedding (constant block)
    # o_ref   : (bt, S+1, C)
    bt = o_ref.shape[0]
    c = o_ref.shape[2]
    body = x_ref[...] + pe_ref[...]                          # broadcast over bt
    cls = jnp.broadcast_to(row0_ref[...], (bt, 1, c))        # cls row per batch
    o_ref[...] = jnp.concatenate([cls, body], axis=1)        # one full store


def _pick_batch_tile(B, S, C, dtype_bytes, block_budget_bytes):
    """Largest batch tile whose (double-buffered) x + out blocks plus the
    constant pe/row0 blocks fit in the VMEM block budget."""
    per_batch = 2 * (S + (S + 1)) * C * dtype_bytes       # x + out, double-buffered
    const_bytes = 2 * (S + 2) * C * dtype_bytes           # pe_img + row0, double-buffered
    avail = block_budget_bytes - const_bytes
    bt = avail // max(per_batch, 1)
    return int(max(1, min(B, bt)))


def _vmem_budgets():
    """Per-chip scoped-VMEM limit and block budget.

    75% of physical VMEM, capped at 96 MiB: v5e/v6e (128 MiB physical) -> 96 MiB,
    v7x (64 MiB physical) -> 48 MiB.  Block budget is ~70% of the limit to leave
    headroom for kernel temporaries.
    """
    try:
        vmem_phys = int(pltpu.get_tpu_info().vmem_capacity_bytes)
    except Exception:
        vmem_phys = 64 * 1024 * 1024  # conservative (v7x-sized) fallback
    vmem_limit = min(int(0.75 * vmem_phys), 96 * 1024 * 1024)
    block_budget = int(0.70 * vmem_limit)
    return vmem_limit, block_budget


def position_embedding_dynamic(x, cls_token, pos_embed, imgH, imgW, patch_size):
    """x: (B, num_patches, C);  cls_token: (1, 1, C);  pos_embed: (1, num_patches+1, C)."""
    B, S, C = x.shape
    newH, newW = imgH // patch_size, imgW // patch_size
    oldH, oldW = imgH // patch_size, imgW // patch_size   # identical by construction
    assert S == newH * newW

    # --- glue (runs once, plain JAX): split + (identity) resample + pre-add ---
    pe_img = pos_embed[0, 1:, :]                                   # (S, C), aligned
    if (newH, newW) != (oldH, oldW):                               # never true here
        Wh = bicubic_matrix(newH, oldH)
        Ww = bicubic_matrix(newW, oldW)
        pe_img = jnp.einsum(
            "Hh,Ww,hwc->HWc", Wh, Ww, pe_img.reshape(oldH, oldW, C)
        ).reshape(S, C)
    pe_img = pe_img.astype(x.dtype)
    row0 = (cls_token.reshape(1, 1, C) + pos_embed[:, 0:1, :]).astype(x.dtype)  # (1,1,C)

    # --- per-chip VMEM sizing and batch tiling --------------------------------
    dtype_bytes = jnp.dtype(x.dtype).itemsize
    vmem_limit, block_budget = _vmem_budgets()
    bt = _pick_batch_tile(B, S, C, dtype_bytes, block_budget)

    # Keep >= 2 grid steps whenever B >= 2 so the "parallel" batch axis can
    # shard across v7x's two TensorCores (negligible cost on single-TC chips).
    if B >= 2:
        bt = min(bt, pl.cdiv(B, 2))

    # Prefer a bt that divides B (full-size blocks every step, balanced TC
    # split) unless that would shrink the tile by more than ~2x.
    best_div = max(d for d in range(1, bt + 1) if B % d == 0)
    if 2 * best_div >= bt:
        bt = best_div

    grid = (pl.cdiv(B, bt),)

    cost = pl.CostEstimate(
        flops=B * (S + 1) * C,
        transcendentals=0,
        bytes_accessed=dtype_bytes * (B * S * C + (S + 2) * C + B * (S + 1) * C),
    )

    out = pl.pallas_call(
        add_pos_kernel,
        out_shape=jax.ShapeDtypeStruct((B, S + 1, C), x.dtype),
        grid_spec=pltpu.PrefetchScalarGridSpec(
            num_scalar_prefetch=0,
            grid=grid,
            in_specs=[
                pl.BlockSpec((bt, S, C), lambda i: (i, 0, 0)),   # per-tile image tokens
                pl.BlockSpec((1, 1, C), lambda i: (0, 0, 0)),    # constant: cls+pe[0]
                pl.BlockSpec((S, C), lambda i: (0, 0)),          # constant: image pe
            ],
            out_specs=pl.BlockSpec((bt, S + 1, C), lambda i: (i, 0, 0)),
        ),
        compiler_params=pltpu.CompilerParams(
            dimension_semantics=("parallel",),
            vmem_limit_bytes=vmem_limit,
        ),
        cost_estimate=cost,
    )(x, row0, pe_img)

    # TODO(synk): nn.Dropout(p=Droprate) -- Droprate is undefined in the source
    # module; eval-mode (identity) dropout is used here.
    return out


if __name__ == "__main__":
    imgH = imgW = 16
    patch_size = 4
    num_features = 32
    num_patches = (imgH // patch_size) * (imgW // patch_size)   # 16
    batch = 2

    key = jax.random.PRNGKey(0)
    kx, kc, kp = jax.random.split(key, 3)
    x = jax.random.normal(kx, (batch, num_patches, num_features), jnp.float32)
    # __init__ uses zeros; initialize with small deterministic values so the
    # test is non-trivial (shapes match the module exactly).
    cls_token = 0.02 * jax.random.normal(kc, (1, 1, num_features), jnp.float32)
    pos_embed = 0.02 * jax.random.normal(
        kp, (1, num_patches + 1, num_features), jnp.float32
    )

    out = position_embedding_dynamic(x, cls_token, pos_embed, imgH, imgW, patch_size)
    out = jax.block_until_ready(out)

    # pure-JAX reference (bicubic resample is identity since new == old shape)
    ref = jnp.concatenate(
        [jnp.broadcast_to(cls_token, (batch, 1, num_features)), x], axis=1
    ) + pos_embed
    assert out.shape == (batch, num_patches + 1, num_features)
    np.testing.assert_allclose(np.asarray(out), np.asarray(ref), rtol=1e-5, atol=1e-5)

    print("KERNEL_OK")
</pallas_src>

<mosaic_0001>
module attributes {stable_mosaic.version = 11 : i64} {
  func.func @add_pos_kernel(%arg0: i32, %arg1: memref<1x16x32xf32, #tpu.memory_space<vmem>>, %arg2: memref<1x1x32xf32, #tpu.memory_space<vmem>>, %arg3: memref<16x32xf32, #tpu.memory_space<vmem>>, %arg4: memref<1x17x32xf32, #tpu.memory_space<vmem>>) attributes {dimension_semantics = [#tpu.dimension_semantics<parallel>], iteration_bounds = array<i64: 2>, scalar_prefetch = 0 : i64, scratch_operands = 0 : i64, tpu.core_type = #tpu.core_type<tc>, window_params = [{transform_indices = @transform_0, window_bounds = array<i64: 1, 16, 32>}, {pipeline_mode = #tpu.pipeline_mode<synchronous>, transform_indices = @transform_1, window_bounds = array<i64: 1, 1, 32>}, {pipeline_mode = #tpu.pipeline_mode<synchronous>, transform_indices = @transform_2, window_bounds = array<i64: 16, 32>}, {transform_indices = @transform_3, window_bounds = array<i64: 1, 17, 32>}]} {
    %c0 = arith.constant 0 : index
    %c0_0 = arith.constant 0 : index
    %c0_1 = arith.constant 0 : index
    %0 = vector.load %arg1[%c0, %c0_0, %c0_1] : memref<1x16x32xf32, #tpu.memory_space<vmem>>, vector<1x16x32xf32>
    %c0_2 = arith.constant 0 : index
    %c0_3 = arith.constant 0 : index
    %1 = vector.load %arg3[%c0_2, %c0_3] : memref<16x32xf32, #tpu.memory_space<vmem>>, vector<16x32xf32>
    %2 = vector.shape_cast %1 : vector<16x32xf32> to vector<1x16x32xf32>
    %3 = arith.addf %0, %2 : vector<1x16x32xf32>
    %c0_4 = arith.constant 0 : index
    %c0_5 = arith.constant 0 : index
    %c0_6 = arith.constant 0 : index
    %4 = vector.load %arg2[%c0_4, %c0_5, %c0_6] : memref<1x1x32xf32, #tpu.memory_space<vmem>>, vector<1x1x32xf32>
    %5 = tpu.concatenate %4, %3 in 1 : vector<1x1x32xf32>, vector<1x16x32xf32> -> vector<1x17x32xf32>
    %c0_7 = arith.constant 0 : index
    %c0_8 = arith.constant 0 : index
    %c0_9 = arith.constant 0 : index
    %6 = vector.load %arg4[%c0_7, %c0_8, %c0_9] : memref<1x17x32xf32, #tpu.memory_space<vmem>>, vector<1x17x32xf32>
    tpu.vector_store %arg4[%c0_7, %c0_8, %c0_9], %5 {strides = array<i32>} : memref<1x17x32xf32, #tpu.memory_space<vmem>>, vector<1x17x32xf32>,
    return
  }
  func.func @transform_0(%arg0: i32) -> (i32, i32, i32) {
    %c0_i32 = arith.constant 0 : i32
    %c0_i32_0 = arith.constant 0 : i32
    %c0_i32_1 = arith.constant 0 : i32
    return %arg0, %c0_i32, %c0_i32_0 : i32, i32, i32
  }
  func.func @transform_1(%arg0: i32) -> (i32, i32, i32) {
    %c0_i32 = arith.constant 0 : i32
    %c0_i32_0 = arith.constant 0 : i32
    %c0_i32_1 = arith.constant 0 : i32
    %c0_i32_2 = arith.constant 0 : i32
    return %c0_i32, %c0_i32_0, %c0_i32_1 : i32, i32, i32
  }
  func.func @transform_2(%arg0: i32) -> (i32, i32) {
    %c0_i32 = arith.constant 0 : i32
    %c0_i32_0 = arith.constant 0 : i32
    %c0_i32_1 = arith.constant 0 : i32
    return %c0_i32, %c0_i32_0 : i32, i32
  }
  func.func @transform_3(%arg0: i32) -> (i32, i32, i32) {
    %c0_i32 = arith.constant 0 : i32
    %c0_i32_0 = arith.constant 0 : i32
    %c0_i32_1 = arith.constant 0 : i32
    return %arg0, %c0_i32, %c0_i32_0 : i32, i32, i32
  }
}

</mosaic_0001>

<llo_original>
// kernel: tpu_custom_call.1
$region0: #{tpu_custom_call.1}
  #allocation0 [shape = 'u32[]', space=smem, size = 0x4, offset = 0x4, fixed_abs, tag = 'smem constant byte address 0x4 - core index']
  #allocation1 [shape = 'u32[144,128]{1,0:T(1,128)}', space=vmem, size = 0x12000, scoped, tag = 'internal scratch']
  %s0 = inlined_call_operand.hbm [shape: f32[2,16,32], index: 0, kind: input, shape index: {}]
  %s1 = inlined_call_operand.vmem [shape: f32[1,1,32], index: 1, kind: input, shape index: {}]
  %s2 = inlined_call_operand.hbm [shape: f32[16,32], index: 2, kind: input, shape index: {}]
  %s3 = inlined_call_operand.vmem [shape: f32[2,17,32], index: 3, kind: output, shape index: {}]
  %s4 = sld [smem:[#allocation0]]
  $region53: #{tpu_custom_call.1} parent=0
    _
  %s6 = ssub.s32 1, %s4
  %s7 = scalar_select 0, %s6, %s4
  $region1: #{tpu_custom_call.1} parent=0
    #allocation2 [shape = 'u8[16384]{0}', space=vmem, size = 0x4000, scoped, tag = 'input window, operand 0']
    #allocation3 [shape = 's32[2]{0}', space=sflag, size = 0x8, scoped, tag = 'scoped memory for tpu_custom_call.1']
    #allocation4 [shape = 'u8[8192]{0}', space=vmem, size = 0x2000, scoped, tag = 'input window, operand 2, single buffered']
    #allocation5 [shape = 's32[1]{0}', space=sflag, size = 0x4, scoped, tag = 'scoped memory for tpu_custom_call.1']
    %8 = vsyncpa [#allocation3], 0
    %s9 = scalar_lea.sflag [#allocation3], 1
    %10 = vsyncpa %s9, 0
    %11 = vsyncpa [#allocation5], 0
    loop: start=0, step=1, limit=4
    $region2: #{tpu_custom_call.1} parent=1 // loop_pre_header
      _
    $region3: #{tpu_custom_call.1} parent=1 // loop_header
      %s13 = sphi 0, %s17
      %p14 = scmp.ge.s32.totalorder %s13, 4
      %s23 = sphi 0, %s25
      %s26 = sphi 0, %s23
      %s27 = sphi 0, %s26
      %s43 = sphi 0, %s27
      %s47 = sphi 0, %s47
      %s49 = sphi 0, %s47
      %s50 = sphi 0, %s49
      %s64 = sphi 0, %s50
      %s68 = sphi 0, %s68
      %s70 = sphi 0, %s68
      %s71 = sphi 0, %s70
      %s85 = sphi 0, %s71
      %s91 = sphi 0, %s93
      %s94 = sphi 0, %s91
      %s95 = sphi 0, %s94
      %s111 = sphi 0, %s95
    $region4: #{tpu_custom_call.1} parent=1 // loop_header_branch
      %16 = sbr.rel (%p14) target = $region8
    $region5: #{tpu_custom_call.1} parent=1 // loop_body
      %s18 = ssub.s32 %s13, 1
      %s19 = ssub.s32 %s13, 2
      %s20 = sadd.s32 %s13, 1
      %s21 = ssub.s32 %s13, %s20
      %p22 = scmp.eq.s32.totalorder %s21, 0
      %s24 = sadd.s32 %s23, 1
      %s25 = scalar_select %p22, %s23, %s24
      %p28 = pneg %p22
      %p29 = scmp.eq.s32.totalorder %s13, 1
      %p30 = por %p28, %p29
      %p31 = scmp.ne.s32.totalorder %s23, %s26
      %p32 = scmp.eq.s32.totalorder %s13, 0
      %p33 = por %p31, %p32
      %p34 = scmp.ne.s32.totalorder %s23, %s26
      %p35 = scmp.eq.s32.totalorder %s18, 1
      %p36 = por %p34, %p35
      %p37 = scmp.ne.s32.totalorder %s26, %s27
      %p38 = scmp.eq.s32.totalorder %s18, 0
      %p39 = por %p37, %p38
      %p40 = scmp.ne.s32.totalorder %s26, %s27
      %p41 = scmp.eq.s32.totalorder %s19, 1
      %p42 = por %p40, %p41
      %p44 = scmp.ne.s32.totalorder %s27, %s43
      %p45 = scmp.eq.s32.totalorder %s19, 0
      %p46 = por %p44, %p45
      %s48 = sadd.s32 %s47, 1
      %p51 = scmp.eq.s32.totalorder %s13, 1
      %p52 = scmp.ne.s32.totalorder %s47, %s49
      %p53 = scmp.eq.s32.totalorder %s13, 0
      %p54 = por %p52, %p53
      %p55 = scmp.ne.s32.totalorder %s47, %s49
      %p56 = scmp.eq.s32.totalorder %s18, 1
      %p57 = por %p55, %p56
      %p58 = scmp.ne.s32.totalorder %s49, %s50
      %p59 = scmp.eq.s32.totalorder %s18, 0
      %p60 = por %p58, %p59
      %p61 = scmp.ne.s32.totalorder %s49, %s50
      %p62 = scmp.eq.s32.totalorder %s19, 1
      %p63 = por %p61, %p62
      %p65 = scmp.ne.s32.totalorder %s50, %s64
      %p66 = scmp.eq.s32.totalorder %s19, 0
      %p67 = por %p65, %p66
      %s69 = sadd.s32 %s68, 1
      %p72 = scmp.eq.s32.totalorder %s13, 1
      %p73 = scmp.ne.s32.totalorder %s68, %s70
      %p74 = scmp.eq.s32.totalorder %s13, 0
      %p75 = por %p73, %p74
      %p76 = scmp.ne.s32.totalorder %s68, %s70
      %p77 = scmp.eq.s32.totalorder %s18, 1
      %p78 = por %p76, %p77
      %p79 = scmp.ne.s32.totalorder %s70, %s71
      %p80 = scmp.eq.s32.totalorder %s18, 0
      %p81 = por %p79, %p80
      %p82 = scmp.ne.s32.totalorder %s70, %s71
      %p83 = scmp.eq.s32.totalorder %s19, 1
      %p84 = por %p82, %p83
      %p86 = scmp.ne.s32.totalorder %s71, %s85
      %p87 = scmp.eq.s32.totalorder %s19, 0
      %p88 = por %p86, %p87
      %s89 = ssub.s32 %s13, %s20
      %p90 = scmp.eq.s32.totalorder %s89, 0
      %s92 = sadd.s32 %s91, 1
      %s93 = scalar_select %p90, %s91, %s92
      %p96 = pneg %p90
      %p97 = scmp.eq.s32.totalorder %s13, 1
      %p98 = por %p96, %p97
      %p99 = scmp.ne.s32.totalorder %s91, %s94
      %p100 = scmp.eq.s32.totalorder %s13, 0
      %p101 = por %p99, %p100
      %p102 = scmp.ne.s32.totalorder %s91, %s94
      %p103 = scmp.eq.s32.totalorder %s18, 1
      %p104 = por %p102, %p103
      %p105 = scmp.ne.s32.totalorder %s94, %s95
      %p106 = scmp.eq.s32.totalorder %s18, 0
      %p107 = por %p105, %p106
      %p108 = scmp.ne.s32.totalorder %s94, %s95
      %p109 = scmp.eq.s32.totalorder %s19, 1
      %p110 = por %p108, %p109
      %p112 = scmp.ne.s32.totalorder %s95, %s111
      %p113 = scmp.eq.s32.totalorder %s19, 0
      %p114 = por %p112, %p113
      %p115 = scmp.le.s32.totalorder 1, %s13
      %p116 = scmp.lt.s32.totalorder %s13, 3
      %p117 = pnand %p115, %p116
      %p118 = pneg %p117
      // Predicated region
      $region9: #{tpu_custom_call.1} parent=5 // pred_check
        _
      $region10: #{tpu_custom_call.1} parent=5 // pred_check_branch
        %120 = sbr.rel (%p117) target = $region12
      $region11: #{tpu_custom_call.1} parent=5 // pred_region
        %s121 = ssub.s32 %s13, 1
        // Predicated region
        $region13: #{tpu_custom_call.1} parent=11 // pred_check
          %p122 = pneg %p60
        $region14: #{tpu_custom_call.1} parent=11 // pred_check_branch
          %124 = sbr.rel (%p122) target = $region16
        $region15: #{tpu_custom_call.1} parent=11 // pred_region
          _
        $region16: #{tpu_custom_call.1} parent=11 // pred_fallthru
          _
        // Predicated region
        $region17: #{tpu_custom_call.1} parent=11 // pred_check
          %p125 = pneg %p81
        $region18: #{tpu_custom_call.1} parent=11 // pred_check_branch
          %127 = sbr.rel (%p125) target = $region20
        $region19: #{tpu_custom_call.1} parent=11 // pred_region
          %s129 = ssub.s32 256, 256
          %130 = vsyncadd [#allocation5], %s129
          %s131 = sshll.u32 [#allocation4], 4
          %s132 = int_to_ptr.vmem [resolvable:$true] %s131
          %137 = dma.hbm_to_vmem [thread:$0]  %s2, 256, %s132, [#allocation5], 128, 128, 8
        $region20: #{tpu_custom_call.1} parent=11 // pred_fallthru
          _
      $region12: #{tpu_custom_call.1} parent=5 // pred_fallthru
        _
      %p138 = scmp.lt.s32.totalorder %s13, 2
      // Predicated region
      $region21: #{tpu_custom_call.1} parent=5 // pred_check
        %p139 = pneg %p138
      $region22: #{tpu_custom_call.1} parent=5 // pred_check_branch
        %141 = sbr.rel (%p139) target = $region24
      $region23: #{tpu_custom_call.1} parent=5 // pred_region
        // Predicated region
        $region25: #{tpu_custom_call.1} parent=23 // pred_check
          %p142 = pneg %p33
        $region26: #{tpu_custom_call.1} parent=23 // pred_check_branch
          %144 = sbr.rel (%p142) target = $region28
        $region27: #{tpu_custom_call.1} parent=23 // pred_region
          %s145 = sand.u32 %s23, 1
          %s146 = scalar_lea.sflag [#allocation3], %s145
          %s147 = sand.u32 %s23, 1
          %s148 = smul.addr %s147, 16
          %s149 = scalar_lea.vmem [#allocation2], %s148
          %s151 = ssub.s32 256, 256
          %152 = vsyncadd %s146, %s151
          %s153 = smul.addr %s13, 2
          %s154 = smul.addr %s153, 128
          %s155 = scalar_lea.hbm %s0, %s154
          %s156 = sshll.u32 %s149, 4
          %s157 = int_to_ptr.vmem [resolvable:$true] %s156
          %162 = dma.hbm_to_vmem [thread:$0]  %s155, 256, %s157, %s146, 128, 128, 8
        $region28: #{tpu_custom_call.1} parent=23 // pred_fallthru
          _
      $region24: #{tpu_custom_call.1} parent=5 // pred_fallthru
        _
      %p163 = scmp.le.s32.totalorder 1, %s13
      %p164 = scmp.lt.s32.totalorder %s13, 3
      %p165 = pnand %p163, %p164
      %p166 = pneg %p165
      // Predicated region
      $region29: #{tpu_custom_call.1} parent=5 // pred_check
        _
      $region30: #{tpu_custom_call.1} parent=5 // pred_check_branch
        %168 = sbr.rel (%p165) target = $region32
      $region31: #{tpu_custom_call.1} parent=5 // pred_region
        %s169 = ssub.s32 %s13, 1
        %s170 = sand.u32 %s26, 1
        %s171 = scalar_lea.sflag [#allocation3], %s170
        %s172 = sand.u32 %s26, 1
        %s173 = smul.addr %s172, 16
        %s174 = scalar_lea.vmem [#allocation2], %s173
        // Predicated region
        $region33: #{tpu_custom_call.1} parent=31 // pred_check
          %p175 = pneg %p39
        $region34: #{tpu_custom_call.1} parent=31 // pred_check_branch
          %177 = sbr.rel (%p175) target = $region36
        $region35: #{tpu_custom_call.1} parent=31 // pred_region
          %178 = dma.done %s171, 256
        $region36: #{tpu_custom_call.1} parent=31 // pred_fallthru
          _
        // Predicated region
        $region37: #{tpu_custom_call.1} parent=31 // pred_check
          %p179 = pneg %p81
        $region38: #{tpu_custom_call.1} parent=31 // pred_check_branch
          %181 = sbr.rel (%p179) target = $region40
        $region39: #{tpu_custom_call.1} parent=31 // pred_region
          %182 = dma.done [#allocation5], 256
        $region40: #{tpu_custom_call.1} parent=31 // pred_fallthru
          _
        %s183 = sand.u32 %s26, 1
        %s184 = scalar_lea.sflag [#allocation3], %s183
        %s185 = sand.u32 %s26, 1
        %s186 = smul.addr %s185, 16
        %s187 = scalar_lea.vmem [#allocation2], %s186
        %p188 = pneg %p39
        %p189 = pneg %p36
        %p190 = pneg %p60
        %p191 = pneg %p57
        %p192 = pneg %p81
        %p193 = pneg %p78
        %p194 = pneg %p107
        %p195 = pneg %p104
        %p196 = scmp.lt.s32.totalorder %s18, 1
        %s197 = scalar_select %p196, %s18, 1
        %s198 = smul.addr %s197, 3
        %s199 = smul.addr %s198, 8
        %s200 = scalar_lea.vmem %s3, %s199
        %p201 = scmp.lt.s32.totalorder %s18, 1
        %s202 = scalar_select %p201, %s18, 1
        %s203 = smul.addr %s202, 3
        %s204 = smul.addr %s203, 8
        %s205 = scalar_lea.vmem %s3, %s204
        %v206 = vld [vmem:[%s174] sm:$0xff]
        %v207 = vld [vmem:[%s174 + $0x8] sm:$0xff]
        %v208 = vld [vmem:[#allocation4] sm:$0xff]
        %v209 = vld [vmem:[#allocation4 + $0x8] sm:$0xff]
        %v210 = vadd.f32 %v206, %v208
        %v211 = vadd.f32 %v207, %v209
        %v212 = vld [vmem:[%s1] sm:$0x1]
        %vm215 = vcmask 1040384
        %v216 = vrot.slane %v210, 7
        %v217 = vrot.slane %v211, 7
        %v218 = vsel %vm215, %v216, %v217
        %v222 = vsel %vm215, %v212, %v216
        %vm223 = vcmask 261120
        %224 = vst.msk [vmem:[%s205] sm:$0xff] %vm223, %v222
        %225 = vst.msk [vmem:[%s205 + $0x8] sm:$0xff] %vm223, %v218
        %vm226 = vcmask 253952
        %227 = vst.msk [vmem:[%s205 + $0x10] sm:$0x1] %vm226, %v217
        %p228 = scmp.lt.s32.totalorder %s18, 1
        %s229 = scalar_select %p228, %s18, 1
        %s230 = smul.addr %s229, 3
        %s231 = smul.addr %s230, 8
        %s232 = scalar_lea.vmem %s3, %s231
        // Predicated region
        $region41: #{tpu_custom_call.1} parent=31 // pred_check
          %p233 = pneg %p104
        $region42: #{tpu_custom_call.1} parent=31 // pred_check_branch
          %235 = sbr.rel (%p233) target = $region44
        $region43: #{tpu_custom_call.1} parent=31 // pred_region
          _
        $region44: #{tpu_custom_call.1} parent=31 // pred_fallthru
          _
      $region32: #{tpu_custom_call.1} parent=5 // pred_fallthru
        _
      %p236 = scmp.le.s32.totalorder 2, %s13
      // Predicated region
      $region45: #{tpu_custom_call.1} parent=5 // pred_check
        %p237 = pneg %p236
      $region46: #{tpu_custom_call.1} parent=5 // pred_check_branch
        %239 = sbr.rel (%p237) target = $region48
      $region47: #{tpu_custom_call.1} parent=5 // pred_region
        %s240 = ssub.s32 %s13, 2
        // Predicated region
        $region49: #{tpu_custom_call.1} parent=47 // pred_check
          %p241 = pneg %p110
        $region50: #{tpu_custom_call.1} parent=47 // pred_check_branch
          %243 = sbr.rel (%p241) target = $region52
        $region51: #{tpu_custom_call.1} parent=47 // pred_region
          %p244 = scmp.lt.s32.totalorder %s19, 1
          %s245 = scalar_select %p244, %s19, 1
          %s246 = smul.addr %s245, 3
          %s247 = smul.addr %s246, 8
          %s248 = scalar_lea.vmem %s3, %s247
        $region52: #{tpu_custom_call.1} parent=47 // pred_fallthru
          _
      $region48: #{tpu_custom_call.1} parent=5 // pred_fallthru
        _
    $region6: #{tpu_custom_call.1} parent=1 // loop_footer
      %s17 = sadd.s32 1, %s13
    $region7: #{tpu_custom_call.1} parent=1 // loop_footer_branch
      %12 = sbr.rel target = $region3
    $region8: #{tpu_custom_call.1} parent=1 // loop_exit
      _
    %249 = vsyncpa [#allocation3], 1
    %s250 = scalar_lea.sflag [#allocation3], 1
    %251 = vsyncpa %s250, 1
    %252 = vsyncpa [#allocation5], 1

</llo_original>
